<compile_context>
chip_gen: v7x
topology: tpu7x:2x2x1
jax: 0.10.0
libtpu: 0.0.40
codegen_flags: <defaults>
</compile_context>

<pallas_src>
import functools

import jax
import jax.numpy as jnp
from jax import lax
from jax.experimental import pallas as pl
from jax.experimental.pallas import tpu as pltpu


def _round_up(x, m):
    return ((x + m - 1) // m) * m


def _pick_tile(total, target, unit):
    """Largest multiple of `unit` that divides `total` and is <= target."""
    best = unit
    d = unit
    top = min(total, max(target, unit))
    while d <= top:
        if total % d == 0:
            best = d
        d += unit
    return best


def _vmem_limit_bytes():
    # Derive from the actual chip (v7x: 64 MiB physical; v5e/v6e: 128 MiB),
    # leaving headroom for Mosaic internals / double buffers.
    try:
        cap = pltpu.get_tpu_info().vmem_capacity_bytes
    except Exception:
        cap = 64 * 1024 * 1024
    return int(min(cap * 3 // 4, 100 * 1024 * 1024))


# -------- pass 1: BN batch statistics -> per-channel scale / shift ----------
def _bn_stats_kernel(x_ref, gamma_ref, beta_ref, scale_ref, shift_ref,
                     sum_ref, sq_ref, *, n_real, bn_eps):
    i = pl.program_id(0)

    @pl.when(i == 0)
    def _():
        sum_ref[...] = jnp.zeros_like(sum_ref)
        sq_ref[...] = jnp.zeros_like(sq_ref)

    # Single streaming pass over the x tile.  Partial sums accumulate into an
    # (8, c_pad) scratch: summing over the leading row-group axis is a pure
    # VPU vreg add, so no cross-sublane XLU reduce sits in the streaming loop.
    x = x_ref[...].astype(jnp.float32)                        # [tn, c_pad]
    x3 = x.reshape(-1, 8, x.shape[-1])                        # [tn//8, 8, c_pad]
    sum_ref[...] += jnp.sum(x3, axis=0)
    sq_ref[...] += jnp.sum(x3 * x3, axis=0)

    @pl.when(i == pl.num_programs(0) - 1)
    def _():
        inv_n = jnp.float32(1.0 / n_real)
        # Collapse the 8 sublanes exactly once.
        s = jnp.sum(sum_ref[...], axis=0, keepdims=True)      # [1, c_pad]
        sq = jnp.sum(sq_ref[...], axis=0, keepdims=True)
        mean = s * inv_n
        # Biased (training-mode) variance via E[x^2] - mean^2, clamped at 0.
        # TODO(synk): switch to a two-pass / Welford update if inputs with
        # |mean| >> std are expected (f32 cancellation could exceed 3e-5).
        var = jnp.maximum(sq * inv_n - mean * mean, 0.0)
        inv_std = lax.rsqrt(var + bn_eps)
        gamma = gamma_ref[...].astype(jnp.float32)
        beta = beta_ref[...].astype(jnp.float32)
        scale = gamma * inv_std
        scale_ref[...] = scale                                 # [1, c_pad]
        shift_ref[...] = beta - mean * scale                   # [1, c_pad]


# -------- pass 2: inverse L2 norm of fc.weight columns (dim=0) --------------
def _wcolnorm_kernel(w_ref, winv_ref, acc_ref):
    j = pl.program_id(0)

    @pl.when(j == 0)
    def _():
        acc_ref[...] = jnp.zeros_like(acc_ref)

    w = w_ref[...].astype(jnp.float32)                         # [tkw, c_pad]
    w3 = w.reshape(-1, 8, w.shape[-1])
    acc_ref[...] += jnp.sum(w3 * w3, axis=0)                   # [8, c_pad]

    @pl.when(j == pl.num_programs(0) - 1)
    def _():
        ss = jnp.sum(acc_ref[...], axis=0, keepdims=True)      # [1, c_pad]
        # 1 / max(||col||, 1e-12) == rsqrt(max(sumsq, 1e-24))
        winv_ref[...] = lax.rsqrt(jnp.maximum(ss, 1e-24))


# -------- pass 3: cached BN+normalize LHS + cosine-logits matmul -------------
def _bnneck_main_kernel(x_ref, scale_ref, shift_ref, winv_ref, w_ref, b_ref,
                        feat_ref, logits_ref, lhs_ref, *, norm, mxu_dtype):
    j = pl.program_id(1)

    # BN-FMA, row L2-normalization and the feature write happen ONCE per row
    # tile (j == 0); the resulting LHS is cached in VMEM and reused by every
    # k-tile, so the inner k loop is pure MXU work + weight DMA.
    @pl.when(j == 0)
    def _():
        x = x_ref[...].astype(jnp.float32)                     # [tn, c_pad]
        xhat = x * scale_ref[...] + shift_ref[...]             # BN folded to FMA
        if norm:
            inv = lax.rsqrt(jnp.maximum(
                jnp.sum(xhat * xhat, axis=-1, keepdims=True), 1e-24))
            feature = xhat * inv                               # F.normalize(dim=-1)
            # Scaling the LHS by the per-channel weight-column inverse norms is
            # identical to normalizing the weight (winv lives on the
            # contraction dim) and keeps the weight tile untouched DMA->MXU.
            lhs = feature * winv_ref[...]
        else:
            feature = xhat
            lhs = xhat
        feat_ref[...] = feature.astype(feat_ref.dtype)
        lhs_ref[...] = lhs.astype(mxu_dtype)

    # Canonical [tn, c] @ [c, tk] matmul (weight pre-transposed in wrapper,
    # contraction (((1,),(0,))) -> no in-kernel transpose on the XLU).
    logits = lax.dot_general(lhs_ref[...], w_ref[...].astype(mxu_dtype),
                             (((1,), (0,)), ((), ())),
                             preferred_element_type=jnp.float32)
    logits_ref[...] = (logits + b_ref[...].astype(jnp.float32)
                       ).astype(logits_ref.dtype)


def bnnecks_forward(x, gamma, beta, weight, bias, *, bn_eps=1e-5, norm=True,
                    mxu_dtype=jnp.float32, tile_n=256, tile_k=512):
    """x: [n, c]; gamma/beta: [c]; weight: [k, c]; bias: [k].

    mxu_dtype=jnp.bfloat16 runs the logits matmul on the MXU at bf16 rate and
    halves the weight HBM stream (accuracy sign-off required); the f32 default
    keeps the strict numerical check below passing.
    """
    n, c = x.shape
    k = weight.shape[0]
    out_dtype = x.dtype
    vmem_limit = _vmem_limit_bytes()
    mxu_itemsize = jnp.dtype(mxu_dtype).itemsize
    out_itemsize = jnp.dtype(out_dtype).itemsize

    # ---- lane-dense padding & tile selection --------------------------------
    c_pad = _round_up(c, 128)
    k_pad = _round_up(k, 128)      # minimal lane padding for classes

    n8 = _round_up(n, 8)
    if n8 <= 16:
        tn = n8                                   # tiny batch: single row tile
    elif n8 <= 2 * tile_n:
        tn = _round_up(-(-n8 // 2), 8)            # 2 row tiles -> both v7x TCs busy
    else:
        tn = tile_n

    def pass3_vmem(tn_, tk_):
        return (2 * tn_ * c_pad * 4                 # x blocks (double-buffered)
                + 2 * c_pad * tk_ * mxu_itemsize    # weight blocks
                + 2 * tn_ * c_pad * out_itemsize    # feature out blocks
                + 2 * tn_ * tk_ * out_itemsize      # logits out blocks
                + tn_ * c_pad * mxu_itemsize        # cached lhs scratch
                + 8 * c_pad * 4 + 2 * tk_ * 4)      # scale/shift/winv/bias

    # Shrink the row tile if a huge channel count would blow the VMEM budget.
    while tn > 8 and pass3_vmem(tn, 128) > int(0.8 * vmem_limit):
        tn = max(8, _round_up(tn // 2, 8))
    n_pad = _round_up(n8, tn)
    n_tiles = n_pad // tn

    if pass3_vmem(tn, k_pad) <= int(0.8 * vmem_limit):
        # Whole (transposed) weight stays VMEM-resident: its block index never
        # changes, so it is DMA'd from HBM exactly once even when n_tiles > 1.
        tk = k_pad
    else:
        tk = _pick_tile(k_pad, tile_k, 128)
    k_tiles = k_pad // tk

    # pass-1 / pass-2 row tiles: pure HBM streaming, so make each grid step
    # move a sizable slab while staying within the VMEM budget.
    stats_rows_budget = max(8, ((int(0.3 * vmem_limit) // (2 * c_pad * 4)) // 8) * 8)
    stats_target = min(1024 if c_pad <= 256 else 512, stats_rows_budget)
    tn_stats = _pick_tile(n_pad, stats_target, 8)
    tkw = _pick_tile(k_pad, min(512, stats_rows_budget), 8)

    # ---- padded operands -----------------------------------------------------
    xp = jnp.pad(x, ((0, n_pad - n), (0, c_pad - c)))
    gp = jnp.pad(gamma.reshape(1, c), ((0, 0), (0, c_pad - c)))
    bp = jnp.pad(beta.reshape(1, c), ((0, 0), (0, c_pad - c)))
    # Pre-transposed weight for a canonical [M,K]@[K,N] MXU contraction.
    wp_t = jnp.pad(weight.T, ((0, c_pad - c), (0, k_pad - k))).astype(mxu_dtype)
    biasp = jnp.pad(bias.reshape(1, k), ((0, 0), (0, k_pad - k))).astype(jnp.float32)

    # ---- pass 1: batch statistics (reduction over n-tiles) -------------------
    scale, shift = pl.pallas_call(
        functools.partial(_bn_stats_kernel, n_real=n, bn_eps=bn_eps),
        grid=(n_pad // tn_stats,),
        in_specs=[pl.BlockSpec((tn_stats, c_pad), lambda i: (i, 0)),
                  pl.BlockSpec((1, c_pad), lambda i: (0, 0)),
                  pl.BlockSpec((1, c_pad), lambda i: (0, 0))],
        out_specs=(pl.BlockSpec((1, c_pad), lambda i: (0, 0)),
                   pl.BlockSpec((1, c_pad), lambda i: (0, 0))),
        out_shape=(jax.ShapeDtypeStruct((1, c_pad), jnp.float32),
                   jax.ShapeDtypeStruct((1, c_pad), jnp.float32)),
        scratch_shapes=[pltpu.VMEM((8, c_pad), jnp.float32),
                        pltpu.VMEM((8, c_pad), jnp.float32)],
        compiler_params=pltpu.CompilerParams(
            dimension_semantics=("arbitrary",),
            vmem_limit_bytes=vmem_limit),
    )(xp, gp, bp)

    # ---- pass 2: fc.weight column inverse norms (reduction over k-tiles) ----
    if norm:
        wp = jnp.pad(weight, ((0, k_pad - k), (0, c_pad - c)))
        winv = pl.pallas_call(
            _wcolnorm_kernel,
            grid=(k_pad // tkw,),
            in_specs=[pl.BlockSpec((tkw, c_pad), lambda j: (j, 0))],
            out_specs=pl.BlockSpec((1, c_pad), lambda j: (0, 0)),
            out_shape=jax.ShapeDtypeStruct((1, c_pad), jnp.float32),
            scratch_shapes=[pltpu.VMEM((8, c_pad), jnp.float32)],
            compiler_params=pltpu.CompilerParams(
                dimension_semantics=("arbitrary",),
                vmem_limit_bytes=vmem_limit),
        )(wp)
    else:
        winv = jnp.ones((1, c_pad), jnp.float32)

    # ---- pass 3: cached normalized LHS + logits, tiled (n_tiles, k_tiles) ----
    feature_p, logits_p = pl.pallas_call(
        functools.partial(_bnneck_main_kernel, norm=norm, mxu_dtype=mxu_dtype),
        grid=(n_tiles, k_tiles),
        in_specs=[pl.BlockSpec((tn, c_pad), lambda i, j: (i, 0)),   # x
                  pl.BlockSpec((1, c_pad), lambda i, j: (0, 0)),    # scale
                  pl.BlockSpec((1, c_pad), lambda i, j: (0, 0)),    # shift
                  pl.BlockSpec((1, c_pad), lambda i, j: (0, 0)),    # winv
                  pl.BlockSpec((c_pad, tk), lambda i, j: (0, j)),   # weight^T
                  pl.BlockSpec((1, tk), lambda i, j: (0, j))],      # bias
        out_specs=(pl.BlockSpec((tn, c_pad), lambda i, j: (i, 0)),  # feature
                   pl.BlockSpec((tn, tk), lambda i, j: (i, j))),    # logits
        out_shape=(jax.ShapeDtypeStruct((n_pad, c_pad), out_dtype),
                   jax.ShapeDtypeStruct((n_pad, k_pad), out_dtype)),
        scratch_shapes=[pltpu.VMEM((tn, c_pad), mxu_dtype)],        # cached lhs
        compiler_params=pltpu.CompilerParams(
            dimension_semantics=("parallel", "arbitrary"),
            vmem_limit_bytes=vmem_limit),
    )(xp, scale, shift, winv, wp_t, biasp)

    # Slice off padding.
    return feature_p[:n, :c], logits_p[:n, :k]


def _reference(x, gamma, beta, weight, bias, bn_eps=1e-5, norm=True):
    mean = jnp.mean(x, axis=0, keepdims=True)
    var = jnp.mean((x - mean) ** 2, axis=0, keepdims=True)   # biased, training
    xhat = (x - mean) / jnp.sqrt(var + bn_eps) * gamma + beta
    if norm:
        f = xhat / jnp.maximum(
            jnp.linalg.norm(xhat, axis=-1, keepdims=True), 1e-12)
        w = weight / jnp.maximum(
            jnp.linalg.norm(weight, axis=0, keepdims=True), 1e-12)
        return f, f @ w.T + bias
    return xhat, xhat @ weight.T + bias


if __name__ == "__main__":
    # Shapes implied by forward: x [n, c]; fc: c -> class_num.
    n, in_channels, class_num = 8, 32, 16

    key = jax.random.PRNGKey(0)
    kx, kw = jax.random.split(key)

    x = jax.random.normal(kx, (n, in_channels), dtype=jnp.float32)

    # Deterministic parameter init mirroring __init__:
    gamma = jnp.ones((in_channels,), jnp.float32)           # BN weight default
    beta = jnp.zeros((in_channels,), jnp.float32)           # BN bias default
    bound = (6.0 / (in_channels + class_num)) ** 0.5        # xavier_uniform_
    weight = jax.random.uniform(kw, (class_num, in_channels),
                                minval=-bound, maxval=bound,
                                dtype=jnp.float32)
    bias = jnp.zeros((class_num,), jnp.float32)             # zeros_

    # TODO(synk): BatchNorm1d running-stats buffer update (training-mode side
    # effect in PyTorch) is intentionally not reproduced; only the forward
    # outputs are.
    feature, logits = bnnecks_forward(x, gamma, beta, weight, bias)
    jax.block_until_ready((feature, logits))

    f_ref, l_ref = _reference(x, gamma, beta, weight, bias)
    assert feature.shape == f_ref.shape and logits.shape == l_ref.shape
    assert jnp.allclose(feature, f_ref, atol=3e-5, rtol=3e-5)
    assert jnp.allclose(logits, l_ref, atol=3e-5, rtol=3e-5)

    print("KERNEL_OK")
</pallas_src>

<mosaic_0001>
module attributes {stable_mosaic.version = 11 : i64} {
  func.func @_bn_stats_kernel(%arg0: i32, %arg1: memref<8x128xf32, #tpu.memory_space<vmem>>, %arg2: memref<1x128xf32, #tpu.memory_space<vmem>>, %arg3: memref<1x128xf32, #tpu.memory_space<vmem>>, %arg4: memref<1x128xf32, #tpu.memory_space<vmem>>, %arg5: memref<1x128xf32, #tpu.memory_space<vmem>>, %arg6: memref<8x128xf32, #tpu.memory_space<vmem>>, %arg7: memref<8x128xf32, #tpu.memory_space<vmem>>) attributes {dimension_semantics = [#tpu.dimension_semantics<arbitrary>], iteration_bounds = array<i64: 1>, scalar_prefetch = 0 : i64, scratch_operands = 2 : i64, tpu.core_type = #tpu.core_type<tc>, window_params = [{transform_indices = @transform_0, window_bounds = array<i64: 8, 128>}, {pipeline_mode = #tpu.pipeline_mode<synchronous>, transform_indices = @transform_1, window_bounds = array<i64: 1, 128>}, {pipeline_mode = #tpu.pipeline_mode<synchronous>, transform_indices = @transform_2, window_bounds = array<i64: 1, 128>}, {pipeline_mode = #tpu.pipeline_mode<synchronous>, transform_indices = @transform_3, window_bounds = array<i64: 1, 128>}, {pipeline_mode = #tpu.pipeline_mode<synchronous>, transform_indices = @transform_4, window_bounds = array<i64: 1, 128>}]} {
    %c0_i32 = arith.constant 0 : i32
    %0 = arith.cmpi eq, %arg0, %c0_i32 : i32
    %1 = arith.extui %0 : i1 to i32
    %c0_i32_0 = arith.constant 0 : i32
    %2 = arith.cmpi ne, %1, %c0_i32_0 : i32
    scf.if %2 {
      %cst_13 = arith.constant 0.000000e+00 : f32
      %17 = vector.broadcast %cst_13 : f32 to vector<8x128xf32>
      %c0_14 = arith.constant 0 : index
      %c0_15 = arith.constant 0 : index
      %18 = vector.load %arg6[%c0_14, %c0_15] : memref<8x128xf32, #tpu.memory_space<vmem>>, vector<8x128xf32>
      tpu.vector_store %arg6[%c0_14, %c0_15], %17 {strides = array<i32>} : memref<8x128xf32, #tpu.memory_space<vmem>>, vector<8x128xf32>,
      %cst_16 = arith.constant 0.000000e+00 : f32
      %19 = vector.broadcast %cst_16 : f32 to vector<8x128xf32>
      %c0_17 = arith.constant 0 : index
      %c0_18 = arith.constant 0 : index
      %20 = vector.load %arg7[%c0_17, %c0_18] : memref<8x128xf32, #tpu.memory_space<vmem>>, vector<8x128xf32>
      tpu.vector_store %arg7[%c0_17, %c0_18], %19 {strides = array<i32>} : memref<8x128xf32, #tpu.memory_space<vmem>>, vector<8x128xf32>,
    } else {
    }
    %c0 = arith.constant 0 : index
    %c0_1 = arith.constant 0 : index
    %3 = vector.load %arg1[%c0, %c0_1] : memref<8x128xf32, #tpu.memory_space<vmem>>, vector<8x128xf32>
    %4 = vector.shape_cast %3 : vector<8x128xf32> to vector<1x8x128xf32>
    %c0_2 = arith.constant 0 : index
    %c0_3 = arith.constant 0 : index
    %5 = vector.load %arg6[%c0_2, %c0_3] : memref<8x128xf32, #tpu.memory_space<vmem>>, vector<8x128xf32>
    %cst = arith.constant dense<0.000000e+00> : vector<8x128xf32>
    %6 = vector.multi_reduction <add>, %4, %cst [0] : vector<1x8x128xf32> to vector<8x128xf32>
    %7 = arith.addf %5, %6 : vector<8x128xf32>
    %c0_4 = arith.constant 0 : index
    %c0_5 = arith.constant 0 : index
    %8 = vector.load %arg6[%c0_4, %c0_5] : memref<8x128xf32, #tpu.memory_space<vmem>>, vector<8x128xf32>
    tpu.vector_store %arg6[%c0_4, %c0_5], %7 {strides = array<i32>} : memref<8x128xf32, #tpu.memory_space<vmem>>, vector<8x128xf32>,
    %c0_6 = arith.constant 0 : index
    %c0_7 = arith.constant 0 : index
    %9 = vector.load %arg7[%c0_6, %c0_7] : memref<8x128xf32, #tpu.memory_space<vmem>>, vector<8x128xf32>
    %10 = arith.mulf %4, %4 : vector<1x8x128xf32>
    %cst_8 = arith.constant dense<0.000000e+00> : vector<8x128xf32>
    %11 = vector.multi_reduction <add>, %10, %cst_8 [0] : vector<1x8x128xf32> to vector<8x128xf32>
    %12 = arith.addf %9, %11 : vector<8x128xf32>
    %c0_9 = arith.constant 0 : index
    %c0_10 = arith.constant 0 : index
    %13 = vector.load %arg7[%c0_9, %c0_10] : memref<8x128xf32, #tpu.memory_space<vmem>>, vector<8x128xf32>
    tpu.vector_store %arg7[%c0_9, %c0_10], %12 {strides = array<i32>} : memref<8x128xf32, #tpu.memory_space<vmem>>, vector<8x128xf32>,
    %c0_i32_11 = arith.constant 0 : i32
    %14 = arith.cmpi eq, %arg0, %c0_i32_11 : i32
    %15 = arith.extui %14 : i1 to i32
    %c0_i32_12 = arith.constant 0 : i32
    %16 = arith.cmpi ne, %15, %c0_i32_12 : i32
    scf.if %16 {
      %c0_13 = arith.constant 0 : index
      %c0_14 = arith.constant 0 : index
      %17 = vector.load %arg6[%c0_13, %c0_14] : memref<8x128xf32, #tpu.memory_space<vmem>>, vector<8x128xf32>
      %cst_15 = arith.constant dense<0.000000e+00> : vector<128xf32>
      %18 = vector.multi_reduction <add>, %17, %cst_15 [0] : vector<8x128xf32> to vector<128xf32>
      %19 = vector.shape_cast %18 : vector<128xf32> to vector<1x128xf32>
      %c0_16 = arith.constant 0 : index
      %c0_17 = arith.constant 0 : index
      %20 = vector.load %arg7[%c0_16, %c0_17] : memref<8x128xf32, #tpu.memory_space<vmem>>, vector<8x128xf32>
      %cst_18 = arith.constant dense<0.000000e+00> : vector<128xf32>
      %21 = vector.multi_reduction <add>, %20, %cst_18 [0] : vector<8x128xf32> to vector<128xf32>
      %22 = vector.shape_cast %21 : vector<128xf32> to vector<1x128xf32>
      %cst_19 = arith.constant 1.250000e-01 : f32
      %23 = vector.broadcast %cst_19 : f32 to vector<1x128xf32>
      %24 = arith.mulf %19, %23 : vector<1x128xf32>
      %cst_20 = arith.constant 1.250000e-01 : f32
      %25 = vector.broadcast %cst_20 : f32 to vector<1x128xf32>
      %26 = arith.mulf %22, %25 : vector<1x128xf32>
      %27 = arith.mulf %24, %24 : vector<1x128xf32>
      %28 = arith.subf %26, %27 : vector<1x128xf32>
      %cst_21 = arith.constant 0.000000e+00 : f32
      %29 = vector.broadcast %cst_21 : f32 to vector<1x128xf32>
      %30 = arith.maximumf %28, %29 : vector<1x128xf32>
      %cst_22 = arith.constant 9.99999974E-6 : f32
      %31 = vector.broadcast %cst_22 : f32 to vector<1x128xf32>
      %32 = arith.addf %30, %31 : vector<1x128xf32>
      %33 = math.rsqrt %32 : vector<1x128xf32>
      %c0_23 = arith.constant 0 : index
      %c0_24 = arith.constant 0 : index
      %34 = vector.load %arg2[%c0_23, %c0_24] : memref<1x128xf32, #tpu.memory_space<vmem>>, vector<1x128xf32>
      %c0_25 = arith.constant 0 : index
      %c0_26 = arith.constant 0 : index
      %35 = vector.load %arg3[%c0_25, %c0_26] : memref<1x128xf32, #tpu.memory_space<vmem>>, vector<1x128xf32>
      %36 = arith.mulf %34, %33 : vector<1x128xf32>
      %c0_27 = arith.constant 0 : index
      %c0_28 = arith.constant 0 : index
      %37 = vector.load %arg4[%c0_27, %c0_28] : memref<1x128xf32, #tpu.memory_space<vmem>>, vector<1x128xf32>
      tpu.vector_store %arg4[%c0_27, %c0_28], %36 {strides = array<i32>} : memref<1x128xf32, #tpu.memory_space<vmem>>, vector<1x128xf32>,
      %38 = arith.mulf %24, %36 : vector<1x128xf32>
      %39 = arith.subf %35, %38 : vector<1x128xf32>
      %c0_29 = arith.constant 0 : index
      %c0_30 = arith.constant 0 : index
      %40 = vector.load %arg5[%c0_29, %c0_30] : memref<1x128xf32, #tpu.memory_space<vmem>>, vector<1x128xf32>
      tpu.vector_store %arg5[%c0_29, %c0_30], %39 {strides = array<i32>} : memref<1x128xf32, #tpu.memory_space<vmem>>, vector<1x128xf32>,
    } else {
    }
    return
  }
  func.func @transform_0(%arg0: i32) -> (i32, i32) {
    %c0_i32 = arith.constant 0 : i32
    %c0_i32_0 = arith.constant 0 : i32
    return %arg0, %c0_i32 : i32, i32
  }
  func.func @transform_1(%arg0: i32) -> (i32, i32) {
    %c0_i32 = arith.constant 0 : i32
    %c0_i32_0 = arith.constant 0 : i32
    %c0_i32_1 = arith.constant 0 : i32
    return %c0_i32, %c0_i32_0 : i32, i32
  }
  func.func @transform_2(%arg0: i32) -> (i32, i32) {
    %c0_i32 = arith.constant 0 : i32
    %c0_i32_0 = arith.constant 0 : i32
    %c0_i32_1 = arith.constant 0 : i32
    return %c0_i32, %c0_i32_0 : i32, i32
  }
  func.func @transform_3(%arg0: i32) -> (i32, i32) {
    %c0_i32 = arith.constant 0 : i32
    %c0_i32_0 = arith.constant 0 : i32
    %c0_i32_1 = arith.constant 0 : i32
    return %c0_i32, %c0_i32_0 : i32, i32
  }
  func.func @transform_4(%arg0: i32) -> (i32, i32) {
    %c0_i32 = arith.constant 0 : i32
    %c0_i32_0 = arith.constant 0 : i32
    %c0_i32_1 = arith.constant 0 : i32
    return %c0_i32, %c0_i32_0 : i32, i32
  }
}

</mosaic_0001>

<llo_original>
// kernel: tpu_custom_call.1
$region0: #{tpu_custom_call.1}
  #allocation0 [shape = 'u32[]', space=smem, size = 0x4, offset = 0x4, fixed_abs, tag = 'smem constant byte address 0x4 - core index']
  #allocation1 [shape = 'u32[144,128]{1,0:T(1,128)}', space=vmem, size = 0x12000, scoped, tag = 'internal scratch']
  #allocation2 [shape = 'f32[8,128]{1,0:T(8,128)}', space=vmem, size = 0x1000, scoped, tag = 'scratch operand']
  #allocation3 [shape = 'f32[8,128]{1,0:T(8,128)}', space=vmem, size = 0x1000, scoped, tag = 'scratch operand']
  %s0 = inlined_call_operand.hbm [shape: f32[8,128], index: 0, kind: input, shape index: {}]
  %s1 = inlined_call_operand.vmem [shape: f32[1,128], index: 1, kind: input, shape index: {}]
  %s2 = inlined_call_operand.vmem [shape: f32[1,128], index: 2, kind: input, shape index: {}]
  %s3 = inlined_call_operand.hbm [shape: f32[1,128], index: 3, kind: output, shape index: {0}]
  %s4 = inlined_call_operand.hbm [shape: f32[1,128], index: 4, kind: output, shape index: {1}]
  %5 = xla_tuple %s3, %s4
  %s6 = sld [smem:[#allocation0]]
  $region42: #{tpu_custom_call.1} parent=0
    _
  %s8 = ssub.s32 1, %s6
  %s9 = scalar_select 0, %s8, %s6
  $region1: #{tpu_custom_call.1} parent=0
    #allocation4 [shape = 'u8[4096]{0}', space=vmem, size = 0x1000, scoped, tag = 'input window, operand 0, single buffered']
    #allocation5 [shape = 's32[1]{0}', space=sflag, size = 0x4, scoped, tag = 'scoped memory for tpu_custom_call.1']
    #allocation6 [shape = 's32[1]{0}', space=sflag, size = 0x4, scoped, tag = 'scoped memory for tpu_custom_call.1']
    #allocation7 [shape = 'u8[512]{0}', space=vmem, size = 0x400, scoped, tag = 'output window, operand 0, single buffered']
    #allocation8 [shape = 'u8[512]{0}', space=vmem, size = 0x400, scoped, tag = 'output window, operand 1, single buffered']
    #allocation9 [shape = 's32[1]{0}', space=sflag, size = 0x4, scoped, tag = 'scoped memory for tpu_custom_call.1']
    %10 = vsyncpa [#allocation5], 0
    %11 = vsyncpa [#allocation6], 0
    %12 = vsyncpa [#allocation9], 0
    // Predicated region
    $region2: #{tpu_custom_call.1} parent=1 // pred_check
      _
    $region3: #{tpu_custom_call.1} parent=1 // pred_check_branch
      %14 = sbr.rel (0) target = $region5
    $region4: #{tpu_custom_call.1} parent=1 // pred_region
      %s16 = ssub.s32 128, 128
      %17 = vsyncadd [#allocation5], %s16
      %s19 = sshll.u32 [#allocation4], 4
      %s20 = int_to_ptr.vmem [resolvable:$true] %s19
      %22 = dma.hbm_to_vmem [thread:$0]  %s0, 128, %s20, [#allocation5]
    $region5: #{tpu_custom_call.1} parent=1 // pred_fallthru
      _
    // Predicated region
    $region6: #{tpu_custom_call.1} parent=1 // pred_check
      _
    $region7: #{tpu_custom_call.1} parent=1 // pred_check_branch
      %24 = sbr.rel (0) target = $region9
    $region8: #{tpu_custom_call.1} parent=1 // pred_region
      _
    $region9: #{tpu_custom_call.1} parent=1 // pred_fallthru
      _
    // Predicated region
    $region10: #{tpu_custom_call.1} parent=1 // pred_check
      _
    $region11: #{tpu_custom_call.1} parent=1 // pred_check_branch
      %26 = sbr.rel (0) target = $region13
    $region12: #{tpu_custom_call.1} parent=1 // pred_region
      _
    $region13: #{tpu_custom_call.1} parent=1 // pred_fallthru
      _
    // Predicated region
    $region14: #{tpu_custom_call.1} parent=1 // pred_check
      _
    $region15: #{tpu_custom_call.1} parent=1 // pred_check_branch
      %28 = sbr.rel (0) target = $region17
    $region16: #{tpu_custom_call.1} parent=1 // pred_region
      %29 = dma.done [#allocation5], 128
    $region17: #{tpu_custom_call.1} parent=1 // pred_fallthru
      _
    %p30 = scmp.eq.s32.totalorder 0, 0
    // Predicated region
    $region18: #{tpu_custom_call.1} parent=1 // pred_check
      %p31 = pneg %p30
    $region19: #{tpu_custom_call.1} parent=1 // pred_check_branch
      %33 = sbr.rel (%p31) target = $region21
    $region20: #{tpu_custom_call.1} parent=1 // pred_region
      %34 = vst [vmem:[#allocation2] sm:$0xff] 0.0
      %35 = vst [vmem:[#allocation3] sm:$0xff] 0.0
    $region21: #{tpu_custom_call.1} parent=1 // pred_fallthru
      _
    %v36 = vld [vmem:[#allocation4] sm:$0xff]
    %v37 = vld [vmem:[#allocation2] sm:$0xff]
    %v38 = vadd.f32 %v36, 0.0
    %v39 = vadd.f32 %v37, %v38
    %40 = vst [vmem:[#allocation2] sm:$0xff] %v39
    %v41 = vld [vmem:[#allocation3] sm:$0xff]
    %v42 = vmul.f32 %v36, %v36
    %v43 = vadd.f32 %v42, 0.0
    %v44 = vadd.f32 %v41, %v43
    %45 = vst [vmem:[#allocation3] sm:$0xff] %v44
    // Predicated region
    $region22: #{tpu_custom_call.1} parent=1 // pred_check
      %p46 = pneg %p30
    $region23: #{tpu_custom_call.1} parent=1 // pred_check_branch
      %48 = sbr.rel (%p46) target = $region25
    $region24: #{tpu_custom_call.1} parent=1 // pred_region
      %v49 = vld [vmem:[#allocation2] sm:$0xff]
      %v50 = vrot.slane %v49, 4
      %v51 = vadd.f32 %v49, %v50
      %v52 = vrot.slane %v51, 2
      %v53 = vadd.f32 %v51, %v52
      %v54 = vrot.slane %v53, 1
      %v55 = vadd.f32 %v53, %v54
      %v56 = vld [vmem:[#allocation3] sm:$0xff]
      %v57 = vrot.slane %v56, 4
      %v58 = vadd.f32 %v56, %v57
      %v59 = vrot.slane %v58, 2
      %v60 = vadd.f32 %v58, %v59
      %v61 = vrot.slane %v60, 1
      %v62 = vadd.f32 %v60, %v61
      %v63 = vmul.f32 %v55, 0.125
      %v64 = vmul.f32 %v62, 0.125
      %v65 = vmul.f32 %v63, %v63
      %v66 = vsub.f32 %v64, %v65
      %v67 = vmax.f32 %v66, 0.0
      %v68 = vadd.f32 %v67, 1e-05
      %v69 = vrsqrt.pop %v68
      %v70 = vld [vmem:[%s1] sm:$0x1]
      %v71 = vld [vmem:[%s2] sm:$0x1]
      %v72 = vmul.f32 %v70, %v69
      %73 = vst [vmem:[#allocation7] sm:$0x1] %v72
      %v74 = vmul.f32 %v63, %v72
      %v75 = vsub.f32 %v71, %v74
      %76 = vst [vmem:[#allocation8] sm:$0x1] %v75
    $region25: #{tpu_custom_call.1} parent=1 // pred_fallthru
      _
    // Predicated region
    $region26: #{tpu_custom_call.1} parent=1 // pred_check
      _
    $region27: #{tpu_custom_call.1} parent=1 // pred_check_branch
      %78 = sbr.rel (0) target = $region29
    $region28: #{tpu_custom_call.1} parent=1 // pred_region
      %s80 = ssub.s32 16, 16
      %81 = vsyncadd [#allocation6], %s80
      %s83 = sshll.u32 [#allocation7], 4
      %s84 = int_to_ptr.vmem [resolvable:$true] %s83
      %86 = dma.vmem_to_hbm [thread:$0]  %s84, 16, %s3, [#allocation6]
    $region29: #{tpu_custom_call.1} parent=1 // pred_fallthru
      _
    // Predicated region
    $region30: #{tpu_custom_call.1} parent=1 // pred_check
      _
    $region31: #{tpu_custom_call.1} parent=1 // pred_check_branch
      %88 = sbr.rel (0) target = $region33
    $region32: #{tpu_custom_call.1} parent=1 // pred_region
      %s90 = ssub.s32 16, 16
      %91 = vsyncadd [#allocation9], %s90
      %s93 = sshll.u32 [#allocation8], 4
      %s94 = int_to_ptr.vmem [resolvable:$true] %s93
      %96 = dma.vmem_to_hbm [thread:$0]  %s94, 16, %s4, [#allocation9]
    $region33: #{tpu_custom_call.1} parent=1 // pred_fallthru
      _
    // Predicated region
    $region34: #{tpu_custom_call.1} parent=1 // pred_check
      _
    $region35: #{tpu_custom_call.1} parent=1 // pred_check_branch
      %98 = sbr.rel (0) target = $region37
    $region36: #{tpu_custom_call.1} parent=1 // pred_region
      %99 = dma.done [#allocation6], 16
    $region37: #{tpu_custom_call.1} parent=1 // pred_fallthru
      _
    // Predicated region
    $region38: #{tpu_custom_call.1} parent=1 // pred_check
      _
    $region39: #{tpu_custom_call.1} parent=1 // pred_check_branch
      %101 = sbr.rel (0) target = $region41
    $region40: #{tpu_custom_call.1} parent=1 // pred_region
      %102 = dma.done [#allocation9], 16
    $region41: #{tpu_custom_call.1} parent=1 // pred_fallthru
      _
    %103 = vsyncpa [#allocation5], 1
    %104 = vsyncpa [#allocation6], 1
    %105 = vsyncpa [#allocation9], 1

</llo_original>
